<compile_context>
chip_gen: v6e
topology: v6e:2x2x1
jax: 0.10.0
libtpu: 0.0.40
codegen_flags: <defaults>
</compile_context>

<pallas_src>
import jax
import jax.numpy as jnp
from jax import lax
from jax.experimental import pallas as pl
from jax.experimental.pallas import tpu as pltpu


# Standard JPEG luminance quantization table (8, 8), deterministic init.
_Y_TABLE = jnp.array(
    [
        [16, 11, 10, 16, 24, 40, 51, 61],
        [12, 12, 14, 19, 26, 58, 60, 55],
        [14, 13, 16, 24, 40, 57, 69, 56],
        [14, 17, 22, 29, 51, 87, 80, 62],
        [18, 22, 37, 56, 68, 109, 103, 77],
        [24, 35, 55, 64, 81, 104, 113, 92],
        [49, 64, 78, 87, 103, 121, 120, 101],
        [72, 92, 95, 98, 112, 100, 103, 99],
    ],
    dtype=jnp.float32,
)


def _diff_round(v):
    """JPEG differentiable rounding: round(v) + (v - round(v))**3."""
    r = jnp.round(v)
    return r + (v - r) ** 3


def _yq_scalar_kernel(x_ref, inv_table_ref, o_ref):
    # out = diff_round(x * (1 / (y_table * factor))); the scalar factor is
    # pre-folded into the (1, L) inverse-table row on the host.
    x = x_ref[...].astype(jnp.float32)          # (tm, L); no-op cast for f32 input
    v = x * inv_table_ref[...]                  # (1, L) broadcast over rows
    o_ref[...] = _diff_round(v)


def _yq_tensor_kernel(x_ref, inv_table_ref, lo_ref, hi_ref, thr_ref, o_ref):
    # Per-batch factors: each packed row spans at most one batch boundary
    # (guaranteed by bpr <= N), so the per-lane inverse factor is a two-segment
    # select: lanes < thr use fac_lo, lanes >= thr use fac_hi.  Exact, VPU-only.
    x = x_ref[...].astype(jnp.float32)                          # (tm, L)
    lane = lax.broadcasted_iota(jnp.int32, x.shape, 1)          # (tm, L)
    fac = jnp.where(lane < thr_ref[...], lo_ref[...], hi_ref[...])  # (tm,1)->(tm,L)
    v = (x * inv_table_ref[...]) * fac
    o_ref[...] = _diff_round(v)


def _round_up(v, m):
    return (v + m - 1) // m * m


def _pick_bpr(total_blocks, max_bpr):
    # Largest number of 8x8 blocks packed per lane-row such that the flat
    # reshape is exact (bpr | B*N) and, for the tensor path, bpr <= N.
    for cand in (16, 8, 4, 2):
        if cand <= max_bpr and total_blocks % cand == 0:
            return cand
    # Odd B*N (or degenerate N < 2 for the tensor path): one block per row.
    # Padding x to avoid this would cost a full extra HBM copy, so accept the
    # (rare) masked-store L=64 layout instead.
    return 1


def _pick_tm(rows, L):
    """Row-tile size: ~4 MiB f32 output blocks, >=4 grid steps when large."""
    if rows < 128 or rows * L * 4 <= (1 << 20):
        return rows                                  # single block
    block_bytes = 4 << 20                            # ~4 MiB f32 output block
    tm_budget = max(32, (block_bytes // (L * 4)) // 32 * 32)
    tm_min4 = _round_up(pl.cdiv(rows, 4), 32)        # >= 4 steps (2 per TC on v7x)
    return min(tm_budget, tm_min4)


def y_quantize(x, factor):
    """Pallas equivalent of _YQuantize.forward with rounding=_jpeg_diff_round.

    Args:
      x: (B, N, 8, 8) array (kept in native dtype; the kernel upcasts like
         x.float()).
      factor: python int/float, a 0-d / size-1 array, or an array of shape (B,)
         (per-batch factor), matching the PyTorch module.
    Returns:
      float32 array of shape (B, N, 8, 8).
    """
    B, N, H, W = x.shape
    assert (H, W) == (8, 8)
    total_blocks = B * N

    scalar_static = isinstance(factor, (int, float))
    fac_arr = None
    if not scalar_static:
        fac_arr = jnp.asarray(factor, dtype=jnp.float32)
        if fac_arr.size not in (1, B):
            raise ValueError(
                f"factor must be a scalar or have {B} entries, got shape {fac_arr.shape}"
            )
    use_scalar_path = scalar_static or fac_arr.size == 1

    # Pack bpr consecutive 8x8 blocks per row -> lane dim L = bpr*64 (>=128 when
    # possible, i.e. unmasked lane-dense loads/stores).
    bpr = _pick_bpr(total_blocks, max_bpr=16 if use_scalar_path else N)
    L = bpr * 64
    rows = total_blocks // bpr

    # Free, copy-less view; input stays in its native dtype through the BlockSpec.
    x2d = jnp.reshape(x, (rows, L))

    tm = _pick_tm(rows, L)
    grid = (pl.cdiv(rows, tm),)          # partial last block handled by Pallas

    x_spec = pl.BlockSpec((tm, L), lambda i: (i, 0))
    t_spec = pl.BlockSpec((1, L), lambda i: (0, 0))     # constant block, fetched once
    o_spec = pl.BlockSpec((tm, L), lambda i: (i, 0))
    out_shape = jax.ShapeDtypeStruct((rows, L), jnp.float32)

    cparams = pltpu.CompilerParams(
        dimension_semantics=("parallel",),
        # 4 double-buffered ~4 MiB blocks + tiny side streams; explicit so the
        # v5e 16 MiB scoped-VMEM default can't bite (<= physical on all gens).
        vmem_limit_bytes=32 * 1024 * 1024,
    )
    ce = pl.CostEstimate(
        flops=10 * rows * L,
        transcendentals=0,
        bytes_accessed=rows * L * (x.dtype.itemsize + 4),
    )

    inv_table_tiled = jnp.tile((1.0 / _Y_TABLE).reshape(-1), (bpr,))    # (L,)

    if use_scalar_path:
        if scalar_static:
            fac_scalar = jnp.float32(factor)
        else:
            fac_scalar = fac_arr.reshape(()).astype(jnp.float32)        # 0-d array
        table_row = (inv_table_tiled / fac_scalar).reshape(1, L).astype(jnp.float32)
        out2d = pl.pallas_call(
            _yq_scalar_kernel,
            out_shape=out_shape,
            grid_spec=pltpu.PrefetchScalarGridSpec(
                num_scalar_prefetch=0,
                grid=grid,
                in_specs=[x_spec, t_spec],
                out_specs=o_spec,
            ),
            compiler_params=cparams,
            cost_estimate=ce,
        )(x2d, table_row)
    else:
        table_row = inv_table_tiled.reshape(1, L).astype(jnp.float32)
        inv_per_batch = (1.0 / fac_arr.reshape(B)).astype(jnp.float32)  # (B,)
        first_blk = jnp.arange(rows, dtype=jnp.int32) * bpr             # (rows,)
        last_blk = first_blk + (bpr - 1)
        b_lo = first_blk // N
        b_hi = last_blk // N                       # == b_lo or b_lo + 1 (bpr <= N)
        fac_lo = inv_per_batch[b_lo].reshape(rows, 1)
        fac_hi = inv_per_batch[b_hi].reshape(rows, 1)
        thr = jnp.where(b_hi > b_lo, (b_hi * N - first_blk) * 64, L)
        thr = thr.astype(jnp.int32).reshape(rows, 1)
        lo_spec = pl.BlockSpec((tm, 1), lambda i: (i, 0))
        hi_spec = pl.BlockSpec((tm, 1), lambda i: (i, 0))
        thr_spec = pl.BlockSpec((tm, 1), lambda i: (i, 0))
        out2d = pl.pallas_call(
            _yq_tensor_kernel,
            out_shape=out_shape,
            grid_spec=pltpu.PrefetchScalarGridSpec(
                num_scalar_prefetch=0,
                grid=grid,
                in_specs=[x_spec, t_spec, lo_spec, hi_spec, thr_spec],
                out_specs=o_spec,
            ),
            compiler_params=cparams,
            cost_estimate=ce,
        )(x2d, table_row, fac_lo, fac_hi, thr)

    # Free reshape back to the module's output shape (no slice, no copy).
    return jnp.reshape(out2d, (B, N, 8, 8))


# ---------------------------------------------------------------------------
# References
# ---------------------------------------------------------------------------
def _reference_div(x, factor):
    """PyTorch-faithful reference: x.float() / (y_table * factor), diff-round."""
    xf = x.astype(jnp.float32)
    if isinstance(factor, (int, float)):
        out = xf / (_Y_TABLE * float(factor))
    else:
        fac = jnp.asarray(factor, dtype=jnp.float32)
        if fac.size == 1:
            out = xf / (_Y_TABLE * fac.reshape(()))
        else:
            out = xf / (_Y_TABLE[None, None] * fac.reshape(-1, 1, 1, 1))
    return _diff_round(out)


def _reference_recip(x, factor):
    """Same association as the kernel (multiply by pre-inverted scales)."""
    xf = x.astype(jnp.float32)
    if isinstance(factor, (int, float)):
        out = xf * ((1.0 / _Y_TABLE) / jnp.float32(factor))[None, None]
    else:
        fac = jnp.asarray(factor, dtype=jnp.float32)
        if fac.size == 1:
            out = xf * ((1.0 / _Y_TABLE) / fac.reshape(()))[None, None]
        else:
            out = (xf * (1.0 / _Y_TABLE)[None, None]) * (1.0 / fac.reshape(-1, 1, 1, 1))
    return _diff_round(out)


def _frac_close(a, b, atol=1e-4, rtol=1e-4):
    ok = jnp.abs(a - b) <= atol + rtol * jnp.abs(b)
    return float(jnp.mean(ok.astype(jnp.float32)))


if __name__ == "__main__":
    key = jax.random.PRNGKey(0)
    k0, k1 = jax.random.split(key)

    # Small case from the module: 2 images, 4 DCT blocks each -> x: (2, 4, 8, 8)
    B, N = 2, 4
    x = jax.random.normal(k0, (B, N, 8, 8), dtype=jnp.float32) * 100.0

    # --- scalar-factor path ---
    out_s = y_quantize(x, 2.0)
    jax.block_until_ready(out_s)
    assert out_s.shape == (B, N, 8, 8) and out_s.dtype == jnp.float32
    assert jnp.allclose(out_s, _reference_recip(x, 2.0), atol=1e-5, rtol=1e-5)
    # vs. the divide-based PyTorch formula: reciprocal-multiply can legitimately
    # flip round() at an exact .5 tie, so require "almost all" elements close.
    assert _frac_close(out_s, _reference_div(x, 2.0)) >= 0.995

    # 0-d jnp factor must take the (traced) scalar path, not the tensor path.
    out_s0 = y_quantize(x, jnp.asarray(2.0))
    jax.block_until_ready(out_s0)
    assert jnp.allclose(out_s0, out_s, atol=1e-6, rtol=1e-6)

    # --- tensor-factor path (per-batch factors) ---
    factor_t = jnp.array([1.0, 3.0], dtype=jnp.float32)
    out_t = y_quantize(x, factor_t)
    jax.block_until_ready(out_t)
    assert out_t.shape == (B, N, 8, 8) and out_t.dtype == jnp.float32
    assert jnp.allclose(out_t, _reference_recip(x, factor_t), atol=1e-5, rtol=1e-5)
    assert _frac_close(out_t, _reference_div(x, factor_t)) >= 0.995

    # --- odd N: packed rows straddle the batch boundary, stays lane-dense ---
    B2, N2 = 2, 257
    x2 = jax.random.normal(k1, (B2, N2, 8, 8), dtype=jnp.float32) * 100.0
    f2 = jnp.array([0.5, 2.5], dtype=jnp.float32)
    out2s = y_quantize(x2, 1.5)
    out2t = y_quantize(x2, f2)
    jax.block_until_ready((out2s, out2t))
    assert jnp.allclose(out2s, _reference_recip(x2, 1.5), atol=1e-5, rtol=1e-5)
    assert jnp.allclose(out2t, _reference_recip(x2, f2), atol=1e-5, rtol=1e-5)

    # --- larger case: multi-step grid with a partial last block (no padding) ---
    B3, N3 = 2, 2560
    x3 = jax.random.normal(k1, (B3, N3, 8, 8), dtype=jnp.float32) * 100.0
    f3 = jnp.array([0.75, 1.25], dtype=jnp.float32)
    out3s = y_quantize(x3, 1.25)
    out3t = y_quantize(x3, f3)
    jax.block_until_ready((out3s, out3t))
    assert jnp.allclose(out3s, _reference_recip(x3, 1.25), atol=1e-5, rtol=1e-5)
    assert jnp.allclose(out3t, _reference_recip(x3, f3), atol=1e-5, rtol=1e-5)

    print("KERNEL_OK")
</pallas_src>

<mosaic_0001>
module attributes {stable_mosaic.version = 11 : i64} {
  func.func @_yq_scalar_kernel(%arg0: i32, %arg1: memref<1x512xf32, #tpu.memory_space<vmem>>, %arg2: memref<1x512xf32, #tpu.memory_space<vmem>>, %arg3: memref<1x512xf32, #tpu.memory_space<vmem>>) attributes {dimension_semantics = [#tpu.dimension_semantics<parallel>], iteration_bounds = array<i64: 1>, scalar_prefetch = 0 : i64, scratch_operands = 0 : i64, tpu.core_type = #tpu.core_type<tc>, window_params = [{transform_indices = @transform_0, window_bounds = array<i64: 1, 512>}, {pipeline_mode = #tpu.pipeline_mode<synchronous>, transform_indices = @transform_1, window_bounds = array<i64: 1, 512>}, {transform_indices = @transform_2, window_bounds = array<i64: 1, 512>}]} {
    %c0 = arith.constant 0 : index
    %c0_0 = arith.constant 0 : index
    %0 = vector.load %arg1[%c0, %c0_0] : memref<1x512xf32, #tpu.memory_space<vmem>>, vector<1x512xf32>
    %c0_1 = arith.constant 0 : index
    %c0_2 = arith.constant 0 : index
    %1 = vector.load %arg2[%c0_1, %c0_2] : memref<1x512xf32, #tpu.memory_space<vmem>>, vector<1x512xf32>
    %2 = arith.mulf %0, %1 : vector<1x512xf32>
    %3 = math.roundeven %2 : vector<1x512xf32>
    %4 = arith.subf %2, %3 : vector<1x512xf32>
    %5 = arith.mulf %4, %4 : vector<1x512xf32>
    %6 = arith.mulf %4, %5 : vector<1x512xf32>
    %7 = arith.addf %3, %6 : vector<1x512xf32>
    %c0_3 = arith.constant 0 : index
    %c0_4 = arith.constant 0 : index
    %8 = vector.load %arg3[%c0_3, %c0_4] : memref<1x512xf32, #tpu.memory_space<vmem>>, vector<1x512xf32>
    tpu.vector_store %arg3[%c0_3, %c0_4], %7 {strides = array<i32>} : memref<1x512xf32, #tpu.memory_space<vmem>>, vector<1x512xf32>,
    return
  }
  func.func @transform_0(%arg0: i32) -> (i32, i32) {
    %c0_i32 = arith.constant 0 : i32
    %c0_i32_0 = arith.constant 0 : i32
    return %arg0, %c0_i32 : i32, i32
  }
  func.func @transform_1(%arg0: i32) -> (i32, i32) {
    %c0_i32 = arith.constant 0 : i32
    %c0_i32_0 = arith.constant 0 : i32
    %c0_i32_1 = arith.constant 0 : i32
    return %c0_i32, %c0_i32_0 : i32, i32
  }
  func.func @transform_2(%arg0: i32) -> (i32, i32) {
    %c0_i32 = arith.constant 0 : i32
    %c0_i32_0 = arith.constant 0 : i32
    return %arg0, %c0_i32 : i32, i32
  }
}

</mosaic_0001>

<llo_original>
// kernel: tpu_custom_call.1
$region0: #{tpu_custom_call.1}
  #allocation0 [shape = 'u32[]', space=smem, size = 0x4, offset = 0x4, fixed_abs, tag = 'smem constant byte address 0x4 - core index']
  #allocation1 [shape = 'u32[144,128]{1,0:T(1,128)}', space=vmem, size = 0x12000, scoped, tag = 'internal scratch']
  %s0 = inlined_call_operand.hbm [shape: f32[1,512], index: 0, kind: input, shape index: {}]
  %s1 = inlined_call_operand.hbm [shape: f32[1,512], index: 1, kind: input, shape index: {}]
  %s2 = inlined_call_operand.hbm [shape: f32[1,512], index: 2, kind: output, shape index: {}]
  %s3 = sld [smem:[#allocation0]]
  $region26: #{tpu_custom_call.1} parent=0
    _
  %s5 = ssub.s32 1, %s3
  %s6 = scalar_select 0, %s5, %s3
  $region1: #{tpu_custom_call.1} parent=0
    #allocation2 [shape = 'u8[2048]{0}', space=vmem, size = 0x800, scoped, tag = 'input window, operand 0, single buffered']
    #allocation3 [shape = 's32[1]{0}', space=sflag, size = 0x4, scoped, tag = 'scoped memory for tpu_custom_call.1']
    #allocation4 [shape = 's32[1]{0}', space=sflag, size = 0x4, scoped, tag = 'scoped memory for tpu_custom_call.1']
    #allocation5 [shape = 'u8[2048]{0}', space=vmem, size = 0x800, scoped, tag = 'input window, operand 1, single buffered']
    #allocation6 [shape = 's32[1]{0}', space=sflag, size = 0x4, scoped, tag = 'scoped memory for tpu_custom_call.1']
    #allocation7 [shape = 'u8[2048]{0}', space=vmem, size = 0x800, scoped, tag = 'output window, operand 0, single buffered']
    %7 = vsyncpa [#allocation3], 0
    %8 = vsyncpa [#allocation6], 0
    %9 = vsyncpa [#allocation4], 0
    // Predicated region
    $region2: #{tpu_custom_call.1} parent=1 // pred_check
      _
    $region3: #{tpu_custom_call.1} parent=1 // pred_check_branch
      %11 = sbr.rel (0) target = $region5
    $region4: #{tpu_custom_call.1} parent=1 // pred_region
      %s13 = ssub.s32 64, 64
      %14 = vsyncadd [#allocation3], %s13
      %s16 = sshll.u32 [#allocation2], 4
      %s17 = int_to_ptr.vmem [resolvable:$true] %s16
      %19 = dma.hbm_to_vmem [thread:$0]  %s0, 64, %s17, [#allocation3]
    $region5: #{tpu_custom_call.1} parent=1 // pred_fallthru
      _
    // Predicated region
    $region6: #{tpu_custom_call.1} parent=1 // pred_check
      _
    $region7: #{tpu_custom_call.1} parent=1 // pred_check_branch
      %21 = sbr.rel (0) target = $region9
    $region8: #{tpu_custom_call.1} parent=1 // pred_region
      %s23 = ssub.s32 64, 64
      %24 = vsyncadd [#allocation6], %s23
      %s26 = sshll.u32 [#allocation5], 4
      %s27 = int_to_ptr.vmem [resolvable:$true] %s26
      %29 = dma.hbm_to_vmem [thread:$0]  %s1, 64, %s27, [#allocation6]
    $region9: #{tpu_custom_call.1} parent=1 // pred_fallthru
      _
    // Predicated region
    $region10: #{tpu_custom_call.1} parent=1 // pred_check
      _
    $region11: #{tpu_custom_call.1} parent=1 // pred_check_branch
      %31 = sbr.rel (0) target = $region13
    $region12: #{tpu_custom_call.1} parent=1 // pred_region
      %32 = dma.done [#allocation3], 64
    $region13: #{tpu_custom_call.1} parent=1 // pred_fallthru
      _
    // Predicated region
    $region14: #{tpu_custom_call.1} parent=1 // pred_check
      _
    $region15: #{tpu_custom_call.1} parent=1 // pred_check_branch
      %34 = sbr.rel (0) target = $region17
    $region16: #{tpu_custom_call.1} parent=1 // pred_region
      %35 = dma.done [#allocation6], 64
    $region17: #{tpu_custom_call.1} parent=1 // pred_fallthru
      _
    %v36 = vld [vmem:[#allocation2] sm:$0xf]
    %v37 = vld [vmem:[#allocation5] sm:$0xf]
    %v38 = vmul.f32 %v36, %v37
    %v39 = vround.ne.pseudo %v38
    %v40 = vsub.f32 %v38, %v39
    %v41 = vmul.f32 %v40, %v40
    %v42 = vmul.f32 %v40, %v41
    %v43 = vadd.f32 %v39, %v42
    %v44 = vlaneseq
    %vm45 = vcmp.ge.s32.totalorder %v44, 0
    %vm46 = vcmp.lt.s32.totalorder %v44, 512
    %vm47 = vmand %vm45, %vm46
    %48 = vst.msk [vmem:[#allocation7] sm:$0xf] %vm47, %v43
    // Predicated region
    $region18: #{tpu_custom_call.1} parent=1 // pred_check
      _
    $region19: #{tpu_custom_call.1} parent=1 // pred_check_branch
      %50 = sbr.rel (0) target = $region21
    $region20: #{tpu_custom_call.1} parent=1 // pred_region
      %s52 = ssub.s32 64, 64
      %53 = vsyncadd [#allocation4], %s52
      %s55 = sshll.u32 [#allocation7], 4
      %s56 = int_to_ptr.vmem [resolvable:$true] %s55
      %58 = dma.vmem_to_hbm [thread:$0]  %s56, 64, %s2, [#allocation4]
    $region21: #{tpu_custom_call.1} parent=1 // pred_fallthru
      _
    // Predicated region
    $region22: #{tpu_custom_call.1} parent=1 // pred_check
      _
    $region23: #{tpu_custom_call.1} parent=1 // pred_check_branch
      %60 = sbr.rel (0) target = $region25
    $region24: #{tpu_custom_call.1} parent=1 // pred_region
      %61 = dma.done [#allocation4], 64
    $region25: #{tpu_custom_call.1} parent=1 // pred_fallthru
      _
    %62 = vsyncpa [#allocation3], 1
    %63 = vsyncpa [#allocation6], 1
    %64 = vsyncpa [#allocation4], 1

</llo_original>
